<compile_context>
chip_gen: v7x
topology: tpu7x:2x2x1
jax: 0.10.0
libtpu: 0.0.40
codegen_flags: <defaults>
</compile_context>

<pallas_src>
import functools

import jax
import jax.numpy as jnp
from jax.experimental import pallas as pl
from jax.experimental.pallas import tpu as pltpu

_MIB = 1024 * 1024


def _layernorm_kernel(x_ref, gamma_ref, beta_ref, o_ref, *, eps, dim):
    x = x_ref[...].astype(jnp.float32)            # (tile_rows, dim)
    gamma = gamma_ref[...].astype(jnp.float32)    # (1, dim)
    beta = beta_ref[...].astype(jnp.float32)      # (1, dim)

    # mean over the last (lane) dim
    mean = jnp.mean(x, axis=-1, keepdims=True)
    centered = x - mean
    # torch.std default: Bessel's correction (ddof=1).  Two-pass centered form
    # keeps the 1e-5 tolerance (single-pass E[x^2]-E[x]^2 can cancel).
    var = jnp.sum(centered * centered, axis=-1, keepdims=True) * (1.0 / (dim - 1))
    std = jnp.sqrt(var)
    # per-row reciprocal column + broadcast multiply instead of a full-tile
    # divide (exact reciprocal so results match the reference to 1e-5).
    inv = 1.0 / (std + eps)
    o_ref[...] = (gamma * (centered * inv) + beta).astype(o_ref.dtype)


def _tpu_vmem_and_cores():
    """(per-TC VMEM bytes, TensorCores per chip).  Falls back to v6e-like."""
    try:
        cap = int(pltpu.get_tpu_info().vmem_capacity_bytes)
    except Exception:
        cap = 128 * _MIB
    # v7x: 64 MiB per TC, 2 TCs/chip.  v5e/v6e: 128 MiB, 1 TC.
    num_tc = 2 if cap <= 64 * _MIB else 1
    return cap, num_tc


def _pick_row_tile(rows, dim, itemsize, sublane, vmem_cap, num_tc):
    """Largest sublane-aligned row tile whose per-step VMEM footprint
    (double-buffered I/O blocks + in-kernel f32 intermediates) fits the
    per-generation budget.  No artificial row cap."""
    if vmem_cap >= 100 * _MIB:      # v5e / v6e: 128 MiB per TC
        budget = 64 * _MIB
    else:                           # v7x: 64 MiB per TC
        budget = 28 * _MIB

    # in + out blocks, each double-buffered, in the I/O dtype ...
    per_row = dim * itemsize * 4
    # ... plus live f32 intermediates inside the body (upcast tile + centered
    # tile for sub-f32 inputs; one extra f32 tile for f32 inputs).
    n_f32 = 1 if itemsize >= 4 else 2
    per_row += n_f32 * dim * 4

    rows_up = pl.cdiv(rows, sublane) * sublane

    t = (budget // per_row) // sublane * sublane
    t = max(t, sublane)
    t = min(t, rows_up)

    if num_tc > 1:
        # v7x: both TensorCores share the "parallel" grid axis.  Nudge the
        # step count to a multiple of the core count when there is enough
        # work, so the last step doesn't leave a core idle.
        steps = pl.cdiv(rows_up, t)
        if steps % num_tc != 0 and rows_up >= num_tc * sublane:
            target = pl.cdiv(steps, num_tc) * num_tc
            t_cand = pl.cdiv(pl.cdiv(rows_up, target), sublane) * sublane
            t_cand = max(t_cand, sublane)
            if pl.cdiv(rows_up, t_cand) % num_tc == 0:
                t = t_cand
    # On single-TC chips (v5e/v6e) we deliberately do NOT split small inputs:
    # halving the tile only doubles per-step pipeline overhead.
    return t


def layer_norm(x, gamma, beta, eps=1e-6, row_tile=None):
    """x: (..., dim). gamma/beta: (dim,). Matches the custom torch LayerNorm."""
    orig_shape = x.shape
    dim = orig_shape[-1]
    assert dim > 1, "dim must be > 1 (unbiased std divides by dim - 1)"

    rows = 1
    for s in orig_shape[:-1]:
        rows *= s
    x2 = x.reshape(rows, dim)
    gamma2 = gamma.reshape(1, dim)
    beta2 = beta.reshape(1, dim)

    itemsize = jnp.dtype(x.dtype).itemsize
    sublane = 8 if itemsize >= 4 else (16 if itemsize == 2 else 32)

    vmem_cap, num_tc = _tpu_vmem_and_cores()
    if row_tile is None:
        row_tile = _pick_row_tile(rows, dim, itemsize, sublane, vmem_cap, num_tc)

    # Ragged last row block handled by Pallas (masked writeback); no pad/slice.
    grid = (pl.cdiv(rows, row_tile),)

    # Per-generation scoped-VMEM limit: leave headroom under physical VMEM.
    vmem_limit = 96 * _MIB if vmem_cap >= 100 * _MIB else 48 * _MIB

    # TODO(synk): dim < 128 under-utilizes the 128-wide lane axis (masked
    # partial stores); real transformer hidden sizes (>=128) are lane-dense.

    kernel = functools.partial(_layernorm_kernel, eps=eps, dim=dim)

    out = pl.pallas_call(
        kernel,
        out_shape=jax.ShapeDtypeStruct((rows, dim), x.dtype),
        grid_spec=pltpu.PrefetchScalarGridSpec(
            num_scalar_prefetch=0,
            grid=grid,
            in_specs=[
                pl.BlockSpec((row_tile, dim), lambda i: (i, 0)),
                pl.BlockSpec((1, dim), lambda i: (0, 0)),   # gamma: constant block
                pl.BlockSpec((1, dim), lambda i: (0, 0)),   # beta:  constant block
            ],
            out_specs=pl.BlockSpec((row_tile, dim), lambda i: (i, 0)),
        ),
        compiler_params=pltpu.CompilerParams(
            dimension_semantics=("parallel",),
            vmem_limit_bytes=vmem_limit,
        ),
    )(x2, gamma2, beta2)

    return out.reshape(orig_shape)


if __name__ == "__main__":
    key = jax.random.PRNGKey(0)
    batch, seq, hidden = 2, 8, 32

    x = jax.random.normal(key, (batch, seq, hidden), dtype=jnp.float32)
    # deterministic parameter init matching nn.Parameter(torch.ones/zeros(dim))
    gamma = jnp.ones((hidden,), dtype=jnp.float32)
    beta = jnp.zeros((hidden,), dtype=jnp.float32)
    eps = 1e-6

    out = layer_norm(x, gamma, beta, eps=eps)
    out = jax.block_until_ready(out)

    # reference (pure JAX), matching the module (unbiased std, eps on std)
    mean = jnp.mean(x, axis=-1, keepdims=True)
    std = jnp.sqrt(jnp.sum((x - mean) ** 2, axis=-1, keepdims=True) / (hidden - 1))
    ref = gamma * (x - mean) / (std + eps) + beta

    assert out.shape == x.shape
    assert jnp.allclose(out, ref, atol=1e-5, rtol=1e-5)
    print("KERNEL_OK")
</pallas_src>

<mosaic_0001>
module attributes {stable_mosaic.version = 11 : i64} {
  func.func @_layernorm_kernel(%arg0: i32, %arg1: memref<16x32xf32, #tpu.memory_space<vmem>>, %arg2: memref<1x32xf32, #tpu.memory_space<vmem>>, %arg3: memref<1x32xf32, #tpu.memory_space<vmem>>, %arg4: memref<16x32xf32, #tpu.memory_space<vmem>>) attributes {dimension_semantics = [#tpu.dimension_semantics<parallel>], iteration_bounds = array<i64: 1>, scalar_prefetch = 0 : i64, scratch_operands = 0 : i64, tpu.core_type = #tpu.core_type<tc>, window_params = [{transform_indices = @transform_0, window_bounds = array<i64: 16, 32>}, {pipeline_mode = #tpu.pipeline_mode<synchronous>, transform_indices = @transform_1, window_bounds = array<i64: 1, 32>}, {pipeline_mode = #tpu.pipeline_mode<synchronous>, transform_indices = @transform_2, window_bounds = array<i64: 1, 32>}, {transform_indices = @transform_3, window_bounds = array<i64: 16, 32>}]} {
    %c0 = arith.constant 0 : index
    %c0_0 = arith.constant 0 : index
    %0 = vector.load %arg1[%c0, %c0_0] : memref<16x32xf32, #tpu.memory_space<vmem>>, vector<16x32xf32>
    %c0_1 = arith.constant 0 : index
    %c0_2 = arith.constant 0 : index
    %1 = vector.load %arg2[%c0_1, %c0_2] : memref<1x32xf32, #tpu.memory_space<vmem>>, vector<1x32xf32>
    %c0_3 = arith.constant 0 : index
    %c0_4 = arith.constant 0 : index
    %2 = vector.load %arg3[%c0_3, %c0_4] : memref<1x32xf32, #tpu.memory_space<vmem>>, vector<1x32xf32>
    %cst = arith.constant dense<0.000000e+00> : vector<16xf32>
    %3 = vector.multi_reduction <add>, %0, %cst [1] : vector<16x32xf32> to vector<16xf32>
    %4 = vector.shape_cast %3 : vector<16xf32> to vector<16x1xf32>
    %cst_5 = arith.constant 3.200000e+01 : f32
    %5 = vector.broadcast %cst_5 : f32 to vector<16x1xf32>
    %6 = arith.divf %4, %5 : vector<16x1xf32>
    %7 = vector.broadcast %6 : vector<16x1xf32> to vector<16x32xf32>
    %8 = arith.subf %0, %7 : vector<16x32xf32>
    %9 = arith.mulf %8, %8 : vector<16x32xf32>
    %cst_6 = arith.constant dense<0.000000e+00> : vector<16xf32>
    %10 = vector.multi_reduction <add>, %9, %cst_6 [1] : vector<16x32xf32> to vector<16xf32>
    %11 = vector.shape_cast %10 : vector<16xf32> to vector<16x1xf32>
    %cst_7 = arith.constant 0.0322580636 : f32
    %12 = vector.broadcast %cst_7 : f32 to vector<16x1xf32>
    %13 = arith.mulf %11, %12 : vector<16x1xf32>
    %14 = math.sqrt %13 : vector<16x1xf32>
    %cst_8 = arith.constant 9.99999997E-7 : f32
    %15 = vector.broadcast %cst_8 : f32 to vector<16x1xf32>
    %16 = arith.addf %14, %15 : vector<16x1xf32>
    %cst_9 = arith.constant 1.000000e+00 : f32
    %17 = vector.broadcast %cst_9 : f32 to vector<16x1xf32>
    %18 = arith.divf %17, %16 : vector<16x1xf32>
    %19 = vector.broadcast %18 : vector<16x1xf32> to vector<16x32xf32>
    %20 = arith.mulf %8, %19 : vector<16x32xf32>
    %21 = vector.broadcast %1 : vector<1x32xf32> to vector<16x32xf32>
    %22 = arith.mulf %21, %20 : vector<16x32xf32>
    %23 = vector.broadcast %2 : vector<1x32xf32> to vector<16x32xf32>
    %24 = arith.addf %22, %23 : vector<16x32xf32>
    %c0_10 = arith.constant 0 : index
    %c0_11 = arith.constant 0 : index
    %25 = vector.load %arg4[%c0_10, %c0_11] : memref<16x32xf32, #tpu.memory_space<vmem>>, vector<16x32xf32>
    tpu.vector_store %arg4[%c0_10, %c0_11], %24 {strides = array<i32>} : memref<16x32xf32, #tpu.memory_space<vmem>>, vector<16x32xf32>,
    return
  }
  func.func @transform_0(%arg0: i32) -> (i32, i32) {
    %c0_i32 = arith.constant 0 : i32
    %c0_i32_0 = arith.constant 0 : i32
    return %arg0, %c0_i32 : i32, i32
  }
  func.func @transform_1(%arg0: i32) -> (i32, i32) {
    %c0_i32 = arith.constant 0 : i32
    %c0_i32_0 = arith.constant 0 : i32
    %c0_i32_1 = arith.constant 0 : i32
    return %c0_i32, %c0_i32_0 : i32, i32
  }
  func.func @transform_2(%arg0: i32) -> (i32, i32) {
    %c0_i32 = arith.constant 0 : i32
    %c0_i32_0 = arith.constant 0 : i32
    %c0_i32_1 = arith.constant 0 : i32
    return %c0_i32, %c0_i32_0 : i32, i32
  }
  func.func @transform_3(%arg0: i32) -> (i32, i32) {
    %c0_i32 = arith.constant 0 : i32
    %c0_i32_0 = arith.constant 0 : i32
    return %arg0, %c0_i32 : i32, i32
  }
}

</mosaic_0001>

<llo_original>
// kernel: tpu_custom_call.1
$region0: #{tpu_custom_call.1}
  #allocation0 [shape = 'u32[]', space=smem, size = 0x4, offset = 0x4, fixed_abs, tag = 'smem constant byte address 0x4 - core index']
  #allocation1 [shape = 'u32[144,128]{1,0:T(1,128)}', space=vmem, size = 0x12000, scoped, tag = 'internal scratch']
  %s0 = inlined_call_operand.hbm [shape: f32[16,32], index: 0, kind: input, shape index: {}]
  %s1 = inlined_call_operand.hbm [shape: f32[1,32], index: 1, kind: input, shape index: {}]
  %s2 = inlined_call_operand.hbm [shape: f32[1,32], index: 2, kind: input, shape index: {}]
  %s3 = inlined_call_operand.hbm [shape: f32[16,32], index: 3, kind: output, shape index: {}]
  %s4 = sld [smem:[#allocation0]]
  $region34: #{tpu_custom_call.1} parent=0
    _
  %s6 = ssub.s32 1, %s4
  %s7 = scalar_select 0, %s6, %s4
  $region1: #{tpu_custom_call.1} parent=0
    #allocation2 [shape = 'u8[8192]{0}', space=vmem, size = 0x2000, scoped, tag = 'input window, operand 0, single buffered']
    #allocation3 [shape = 's32[1]{0}', space=sflag, size = 0x4, scoped, tag = 'scoped memory for tpu_custom_call.1']
    #allocation4 [shape = 's32[1]{0}', space=sflag, size = 0x4, scoped, tag = 'scoped memory for tpu_custom_call.1']
    #allocation5 [shape = 'u8[512]{0}', space=vmem, size = 0x400, scoped, tag = 'input window, operand 1, single buffered']
    #allocation6 [shape = 's32[1]{0}', space=sflag, size = 0x4, scoped, tag = 'scoped memory for tpu_custom_call.1']
    #allocation7 [shape = 'u8[512]{0}', space=vmem, size = 0x400, scoped, tag = 'input window, operand 2, single buffered']
    #allocation8 [shape = 'u8[8192]{0}', space=vmem, size = 0x2000, scoped, tag = 'output window, operand 0, single buffered']
    %8 = vsyncpa [#allocation3], 0
    %9 = vsyncpa [#allocation6], 0
    %10 = vsyncpa [#allocation4], 0
    // Predicated region
    $region2: #{tpu_custom_call.1} parent=1 // pred_check
      _
    $region3: #{tpu_custom_call.1} parent=1 // pred_check_branch
      %12 = sbr.rel (0) target = $region5
    $region4: #{tpu_custom_call.1} parent=1 // pred_region
      %s14 = ssub.s32 256, 256
      %15 = vsyncadd [#allocation3], %s14
      %s16 = sshll.u32 [#allocation2], 4
      %s17 = int_to_ptr.vmem [resolvable:$true] %s16
      %22 = dma.hbm_to_vmem [thread:$0]  %s0, 256, %s17, [#allocation3], 128, 128, 8
    $region5: #{tpu_custom_call.1} parent=1 // pred_fallthru
      _
    // Predicated region
    $region6: #{tpu_custom_call.1} parent=1 // pred_check
      _
    $region7: #{tpu_custom_call.1} parent=1 // pred_check_branch
      %24 = sbr.rel (0) target = $region9
    $region8: #{tpu_custom_call.1} parent=1 // pred_region
      %s26 = ssub.s32 16, 16
      %27 = vsyncadd [#allocation6], %s26
      %s29 = sshll.u32 [#allocation5], 4
      %s30 = int_to_ptr.vmem [resolvable:$true] %s29
      %32 = dma.hbm_to_vmem [thread:$0]  %s1, 16, %s30, [#allocation6]
    $region9: #{tpu_custom_call.1} parent=1 // pred_fallthru
      _
    // Predicated region
    $region10: #{tpu_custom_call.1} parent=1 // pred_check
      _
    $region11: #{tpu_custom_call.1} parent=1 // pred_check_branch
      %34 = sbr.rel (0) target = $region13
    $region12: #{tpu_custom_call.1} parent=1 // pred_region
      %s36 = ssub.s32 16, 16
      %37 = vsyncadd [#allocation6], %s36
      %s39 = sshll.u32 [#allocation7], 4
      %s40 = int_to_ptr.vmem [resolvable:$true] %s39
      %42 = dma.hbm_to_vmem [thread:$0]  %s2, 16, %s40, [#allocation6]
    $region13: #{tpu_custom_call.1} parent=1 // pred_fallthru
      _
    // Predicated region
    $region14: #{tpu_custom_call.1} parent=1 // pred_check
      _
    $region15: #{tpu_custom_call.1} parent=1 // pred_check_branch
      %44 = sbr.rel (0) target = $region17
    $region16: #{tpu_custom_call.1} parent=1 // pred_region
      %45 = dma.done [#allocation3], 256
    $region17: #{tpu_custom_call.1} parent=1 // pred_fallthru
      _
    // Predicated region
    $region18: #{tpu_custom_call.1} parent=1 // pred_check
      _
    $region19: #{tpu_custom_call.1} parent=1 // pred_check_branch
      %47 = sbr.rel (0) target = $region21
    $region20: #{tpu_custom_call.1} parent=1 // pred_region
      %48 = dma.done [#allocation6], 16
    $region21: #{tpu_custom_call.1} parent=1 // pred_fallthru
      _
    // Predicated region
    $region22: #{tpu_custom_call.1} parent=1 // pred_check
      _
    $region23: #{tpu_custom_call.1} parent=1 // pred_check_branch
      %50 = sbr.rel (0) target = $region25
    $region24: #{tpu_custom_call.1} parent=1 // pred_region
      %51 = dma.done [#allocation6], 16
    $region25: #{tpu_custom_call.1} parent=1 // pred_fallthru
      _
    %v52 = vld [vmem:[#allocation2] sm:$0xff]
    %v53 = vld [vmem:[#allocation2 + $0x8] sm:$0xff]
    %v54 = vld [vmem:[#allocation5] sm:$0x1]
    %v55 = vld [vmem:[#allocation7] sm:$0x1]
    %vm56 = vcmask 261120
    %v57 = vsel %vm56, %v52, 0.0
    %58 = vadd.xlane.f32.xlu0 %v57
    %v59 = vpop.xlane.xlu0 %58
    %v60 = vsel %vm56, %v53, 0.0
    %61 = vadd.xlane.f32.xlu0 %v60
    %v62 = vpop.xlane.xlu0 %61
    %v63 = vrcp.pop 32.0
    %v64 = vmul.f32 %v59, %v63
    %v65 = vmul.f32 %v62, %v63
    %v66 = vsub.f32 %v52, %v64
    %v67 = vsub.f32 %v53, %v65
    %v68 = vmul.f32 %v66, %v66
    %v69 = vmul.f32 %v67, %v67
    %v70 = vsel %vm56, %v68, 0.0
    %71 = vadd.xlane.f32.xlu0 %v70
    %v72 = vpop.xlane.xlu0 %71
    %v73 = vsel %vm56, %v69, 0.0
    %74 = vadd.xlane.f32.xlu0 %v73
    %v75 = vpop.xlane.xlu0 %74
    %v76 = vmul.f32 %v72, 0.032258064
    %v77 = vmul.f32 %v75, 0.032258064
    %v78 = vrsqrt.pop %v76
    %v79 = vmul.f32 %v76, %v78
    %vm80 = vcmp.eq.f32.partialorder %v76, inf
    %v81 = vsel %vm80, %v76, %v79
    %vm82 = vcmp.eq.f32.partialorder %v76, 0.0
    %v83 = vand.u32 %v76, 2147483648
    %v84 = vsel %vm82, %v83, %v81
    %v85 = vrsqrt.pop %v77
    %v86 = vmul.f32 %v77, %v85
    %vm87 = vcmp.eq.f32.partialorder %v77, inf
    %v88 = vsel %vm87, %v77, %v86
    %vm89 = vcmp.eq.f32.partialorder %v77, 0.0
    %v90 = vand.u32 %v77, 2147483648
    %v91 = vsel %vm89, %v90, %v88
    %v92 = vadd.f32 %v84, 1e-06
    %v93 = vadd.f32 %v91, 1e-06
    %v94 = vrcp.pop %v92
    %v95 = vmul.f32 1.0, %v94
    %v96 = vrcp.pop %v93
    %v97 = vmul.f32 1.0, %v96
    %v98 = vmul.f32 %v66, %v95
    %v99 = vmul.f32 %v67, %v97
    %v101 = vlaneseq
    %v102 = vshrl.u32 %v101, 7
    %v103 = vsub.s32 0, %v102
    %v104 = vrot.slane %v54, %v103
    %v106 = vmul.f32 %v104, %v98
    %v107 = vmul.f32 %v104, %v99
    %v109 = vlaneseq
    %v110 = vshrl.u32 %v109, 7
    %v111 = vsub.s32 0, %v110
    %v112 = vrot.slane %v55, %v111
    %v114 = vadd.f32 %v106, %v112
    %v115 = vadd.f32 %v107, %v112
    %116 = vst.msk [vmem:[#allocation8] sm:$0xff] %vm56, %v114
    %117 = vst.msk [vmem:[#allocation8 + $0x8] sm:$0xff] %vm56, %v115
    // Predicated region
    $region26: #{tpu_custom_call.1} parent=1 // pred_check
      _
    $region27: #{tpu_custom_call.1} parent=1 // pred_check_branch
      %119 = sbr.rel (0) target = $region29
    $region28: #{tpu_custom_call.1} parent=1 // pred_region
      %s121 = ssub.s32 256, 256
      %122 = vsyncadd [#allocation4], %s121
      %s123 = sshll.u32 [#allocation8], 4
      %s124 = int_to_ptr.vmem [resolvable:$true] %s123
      %129 = dma.vmem_to_hbm [thread:$0]  %s124, 256, %s3, [#allocation4], 128, 128, 8
    $region29: #{tpu_custom_call.1} parent=1 // pred_fallthru
      _
    // Predicated region
    $region30: #{tpu_custom_call.1} parent=1 // pred_check
      _
    $region31: #{tpu_custom_call.1} parent=1 // pred_check_branch
      %131 = sbr.rel (0) target = $region33
    $region32: #{tpu_custom_call.1} parent=1 // pred_region
      %132 = dma.done [#allocation4], 256
    $region33: #{tpu_custom_call.1} parent=1 // pred_fallthru
      _
    %133 = vsyncpa [#allocation3], 1
    %134 = vsyncpa [#allocation6], 1
    %135 = vsyncpa [#allocation4], 1

</llo_original>
